<compile_context>
chip_gen: v6e
topology: v6e:2x2x1
jax: 0.10.0
libtpu: 0.0.40
codegen_flags: <defaults>
</compile_context>

<pallas_src>
import functools

import jax
import jax.numpy as jnp
from jax.experimental import pallas as pl
from jax.experimental.pallas import tpu as pltpu

LANE = 128
_MAX_TM = 16384            # ~2 MiB x-tile at hidden=32 f32; review's 8K-32K sweet spot
_VMEM_HEADROOM = 8 << 20   # leave room for Mosaic internal scratch


def _round_up(a, b):
    return (a + b - 1) // b * b


def routing_kernel(x_ref, w1_ref, b1_ref, w2_ref, b2_ref, o_ref, *, num_layers):
    # x tile: (TM, H) in its native dtype -> MXU with f32 accumulation.
    x = x_ref[...]

    # Linear(hidden, hidden) + ReLU, accumulate in f32.
    h = jnp.dot(x, w1_ref[...], preferred_element_type=jnp.float32) + b1_ref[...]
    h = jnp.maximum(h, 0.0)
    # TODO(synk): for hidden >= 1024, chunk this matmul's N dim (256-wide) and fuse
    # ReLU + the second matmul's partials instead of materializing the full h.

    # Linear(hidden, L_pad); feed the MXU in the weight dtype (bf16-friendly).
    logits = (
        jnp.dot(h.astype(w2_ref.dtype), w2_ref[...],
                preferred_element_type=jnp.float32)
        + b2_ref[...]
    )

    # Numerically stable softmax over the lane-dense padded last dim.
    # Padded columns carry a -1e30 bias -> exp() == 0, so they don't perturb
    # the real columns.
    m = jnp.max(logits, axis=-1, keepdims=True)
    e = jnp.exp(logits - m)
    denom = jnp.sum(e, axis=-1, keepdims=True)

    # EUP approximate reciprocal (separate VLIW slot) + 2 Newton steps on the
    # (TM,1) column -> f32-accurate 1/denom without a VPU divide.
    r = pl.reciprocal(denom, approx=True)
    r = r * (2.0 - denom * r)
    r = r * (2.0 - denom * r)
    p = e * r                                    # (TM, L_pad) f32

    # Transposed, lane-dense store: only num_layers rows go back to HBM.
    p_t = jnp.transpose(p)                       # (L_pad, TM) via XLU
    o_ref[...] = p_t[:num_layers, :].astype(o_ref.dtype)


def _pick_tm(M, hidden, L_pad, num_layers, in_itemsize, w_itemsize, vmem_limit):
    """Derive the row-tile size from the VMEM budget."""
    # Sublane packing granularity: 8 rows (f32), 16 (bf16), 32 (int8/fp8).
    sub = max(8, 32 // in_itemsize)
    if M <= 1024:
        return _round_up(M, sub)                 # single small tile

    weight_bytes = (hidden * hidden + hidden * L_pad) * w_itemsize + (hidden + L_pad) * 4
    # Conservative per-row VMEM: double-buffered x/out tiles + f32 temporaries
    # (h, logits, e, p, p^T) the compiler may materialize.
    per_row = (2 * hidden * in_itemsize
               + 2 * num_layers * in_itemsize
               + (hidden + 4 * L_pad) * 4)
    avail = vmem_limit - weight_bytes - _VMEM_HEADROOM
    tm = int(avail // per_row) if avail > 0 else 512
    tm = max(min(tm, _MAX_TM), 512)
    # Keep >= 2 grid steps so the "parallel" axis can split across v7x's 2 TCs.
    tm = min(tm, _round_up(pl.cdiv(M, 2), 512))
    return max((tm // 512) * 512, sub)


def dynamic_routing(x, w1, b1, w2, b2, *, compute_dtype=None):
    """x: (..., hidden_dim) -> (..., num_layers), matching the PyTorch forward.

    Weights are stored (in, out), i.e. transposed vs. torch Linear.weight.
    compute_dtype=jnp.bfloat16 halves weight/x VMEM+HBM traffic (accumulation
    and softmax stay f32); default keeps the input dtype (module semantics).
    """
    hidden_dim = x.shape[-1]
    num_layers = w2.shape[-1]
    lead_shape = x.shape[:-1]
    cdt = jnp.dtype(compute_dtype) if compute_dtype is not None else jnp.dtype(x.dtype)

    x2d = x.reshape(-1, hidden_dim).astype(cdt)
    M = x2d.shape[0]

    # ---- Lane-dense compute: pad num_layers to a multiple of 128 ------------
    L_pad = _round_up(num_layers, LANE)
    w1_c = w1.astype(cdt)
    w2_p = jnp.zeros((hidden_dim, L_pad), dtype=cdt).at[:, :num_layers].set(w2.astype(cdt))
    b1_p = b1.astype(jnp.float32).reshape(1, hidden_dim)
    b2_p = (
        jnp.full((1, L_pad), -1e30, dtype=jnp.float32)
        .at[:, :num_layers]
        .set(b2.astype(jnp.float32))
    )

    in_isz = jnp.dtype(cdt).itemsize
    w_isz = in_isz

    # ---- Per-generation VMEM budget -> tile size ----------------------------
    try:
        vmem_cap = int(pltpu.get_tpu_info().vmem_capacity_bytes)
    except Exception:
        vmem_cap = 64 << 20                       # conservative fallback (v7x-sized)
    vmem_limit = min((vmem_cap * 3) // 4, 96 << 20)   # ~96 MiB on v5e/v6e, ~48 MiB on v7x

    TM = _pick_tm(M, hidden_dim, L_pad, num_layers, in_isz, w_isz, vmem_limit)
    M_pad = pl.cdiv(M, TM) * TM
    if M_pad != M:
        x2d = jnp.pad(x2d, ((0, M_pad - M), (0, 0)))  # zero rows: harmless, sliced off
    grid = (M_pad // TM,)

    flops = 2 * M_pad * hidden_dim * (hidden_dim + L_pad)
    bytes_accessed = (
        M_pad * hidden_dim * in_isz                              # x stream
        + (hidden_dim * hidden_dim + hidden_dim * L_pad) * w_isz  # weights (once)
        + (hidden_dim + L_pad) * 4                                # biases (f32)
        + num_layers * M_pad * in_isz                             # transposed output
    )

    kernel = functools.partial(routing_kernel, num_layers=num_layers)

    out_t = pl.pallas_call(
        kernel,
        out_shape=jax.ShapeDtypeStruct((num_layers, M_pad), cdt),
        grid=grid,
        in_specs=[
            # x: streamed row tile (default double-buffering).
            pl.BlockSpec((TM, hidden_dim), lambda i: (i, 0)),
            # Grid-invariant weights/biases: resident + single-buffered.
            pl.BlockSpec((hidden_dim, hidden_dim), lambda i: (0, 0),
                         pipeline_mode=pl.Buffered(1)),
            pl.BlockSpec((1, hidden_dim), lambda i: (0, 0),
                         pipeline_mode=pl.Buffered(1)),
            pl.BlockSpec((hidden_dim, L_pad), lambda i: (0, 0),
                         pipeline_mode=pl.Buffered(1)),
            pl.BlockSpec((1, L_pad), lambda i: (0, 0),
                         pipeline_mode=pl.Buffered(1)),
        ],
        # Transposed output: M on the lane axis, exactly num_layers rows written.
        out_specs=pl.BlockSpec((num_layers, TM), lambda i: (0, i)),
        compiler_params=pltpu.CompilerParams(
            dimension_semantics=("parallel",),       # 2 TCs on v7x; neutral elsewhere
            vmem_limit_bytes=int(vmem_limit),
        ),
        cost_estimate=pl.CostEstimate(
            flops=flops,
            transcendentals=M_pad * L_pad,
            bytes_accessed=bytes_accessed,
        ),
    )(x2d, w1_c, b1_p, w2_p, b2_p)

    out = out_t[:, :M].T.reshape(*lead_shape, num_layers)
    return out.astype(x.dtype)


def _reference(x, w1, b1, w2, b2):
    h = jnp.maximum(x @ w1 + b1, 0.0)
    logits = h @ w2 + b2
    return jax.nn.softmax(logits, axis=-1)


if __name__ == "__main__":
    # Small shapes consistent with the module: (batch=2, seq=8, hidden=32), num_layers=4
    batch, seq, hidden_dim, num_layers = 2, 8, 32, 4

    key = jax.random.PRNGKey(0)
    kx, k1, kb1, k2, kb2 = jax.random.split(key, 5)

    x = jax.random.normal(kx, (batch, seq, hidden_dim), dtype=jnp.float32)

    # Deterministic parameter init (stored (in, out), i.e. transposed vs torch Linear.weight)
    w1 = jax.random.normal(k1, (hidden_dim, hidden_dim), dtype=jnp.float32) * 0.1
    b1 = jax.random.normal(kb1, (hidden_dim,), dtype=jnp.float32) * 0.1
    w2 = jax.random.normal(k2, (hidden_dim, num_layers), dtype=jnp.float32) * 0.1
    b2 = jax.random.normal(kb2, (num_layers,), dtype=jnp.float32) * 0.1

    out = dynamic_routing(x, w1, b1, w2, b2)
    out = jax.block_until_ready(out)

    ref = _reference(x, w1, b1, w2, b2)
    assert out.shape == (batch, seq, num_layers)
    assert jnp.allclose(out, ref, atol=1e-5, rtol=1e-5), "mismatch vs reference"
    assert jnp.allclose(jnp.sum(out, axis=-1), 1.0, atol=1e-4), "softmax rows must sum to 1"

    print("KERNEL_OK")
</pallas_src>

<mosaic_0001>
module attributes {stable_mosaic.version = 11 : i64} {
  func.func @routing_kernel(%arg0: i32, %arg1: memref<16x32xf32, #tpu.memory_space<vmem>>, %arg2: memref<32x32xf32, #tpu.memory_space<vmem>>, %arg3: memref<1x32xf32, #tpu.memory_space<vmem>>, %arg4: memref<32x128xf32, #tpu.memory_space<vmem>>, %arg5: memref<1x128xf32, #tpu.memory_space<vmem>>, %arg6: memref<4x16xf32, #tpu.memory_space<vmem>>) attributes {dimension_semantics = [#tpu.dimension_semantics<parallel>], iteration_bounds = array<i64: 1>, scalar_prefetch = 0 : i64, scratch_operands = 0 : i64, tpu.core_type = #tpu.core_type<tc>, window_params = [{transform_indices = @transform_0, window_bounds = array<i64: 16, 32>}, {pipeline_mode = #tpu.pipeline_mode<synchronous>, transform_indices = @transform_1, window_bounds = array<i64: 32, 32>}, {pipeline_mode = #tpu.pipeline_mode<synchronous>, transform_indices = @transform_2, window_bounds = array<i64: 1, 32>}, {pipeline_mode = #tpu.pipeline_mode<synchronous>, transform_indices = @transform_3, window_bounds = array<i64: 32, 128>}, {pipeline_mode = #tpu.pipeline_mode<synchronous>, transform_indices = @transform_4, window_bounds = array<i64: 1, 128>}, {transform_indices = @transform_5, window_bounds = array<i64: 4, 16>}]} {
    %c0 = arith.constant 0 : index
    %c0_0 = arith.constant 0 : index
    %0 = vector.load %arg1[%c0, %c0_0] : memref<16x32xf32, #tpu.memory_space<vmem>>, vector<16x32xf32>
    %c0_1 = arith.constant 0 : index
    %c0_2 = arith.constant 0 : index
    %1 = vector.load %arg2[%c0_1, %c0_2] : memref<32x32xf32, #tpu.memory_space<vmem>>, vector<32x32xf32>
    %cst = arith.constant dense<0.000000e+00> : vector<16x32xf32>
    %2 = tpu.matmul %0, %1, %cst {dimension_numbers = #tpu.dot_dimension_numbers<[1], [0], [0], [1], [0, 0, 1, 1], [], []>} : vector<16x32xf32>, vector<32x32xf32>, vector<16x32xf32> -> vector<16x32xf32>
    %c0_3 = arith.constant 0 : index
    %c0_4 = arith.constant 0 : index
    %3 = vector.load %arg3[%c0_3, %c0_4] : memref<1x32xf32, #tpu.memory_space<vmem>>, vector<1x32xf32>
    %4 = vector.broadcast %3 : vector<1x32xf32> to vector<16x32xf32>
    %5 = arith.addf %2, %4 : vector<16x32xf32>
    %cst_5 = arith.constant 0.000000e+00 : f32
    %6 = vector.broadcast %cst_5 : f32 to vector<16x32xf32>
    %7 = arith.maximumf %5, %6 : vector<16x32xf32>
    %c0_6 = arith.constant 0 : index
    %c0_7 = arith.constant 0 : index
    %8 = vector.load %arg4[%c0_6, %c0_7] : memref<32x128xf32, #tpu.memory_space<vmem>>, vector<32x128xf32>
    %cst_8 = arith.constant dense<0.000000e+00> : vector<16x128xf32>
    %9 = tpu.matmul %7, %8, %cst_8 {dimension_numbers = #tpu.dot_dimension_numbers<[1], [0], [0], [1], [0, 0, 1, 1], [], []>} : vector<16x32xf32>, vector<32x128xf32>, vector<16x128xf32> -> vector<16x128xf32>
    %c0_9 = arith.constant 0 : index
    %c0_10 = arith.constant 0 : index
    %10 = vector.load %arg5[%c0_9, %c0_10] : memref<1x128xf32, #tpu.memory_space<vmem>>, vector<1x128xf32>
    %11 = vector.broadcast %10 : vector<1x128xf32> to vector<16x128xf32>
    %12 = arith.addf %9, %11 : vector<16x128xf32>
    %cst_11 = arith.constant dense<0xFF800000> : vector<16xf32>
    %13 = vector.multi_reduction <maximumf>, %12, %cst_11 [1] : vector<16x128xf32> to vector<16xf32>
    %14 = vector.shape_cast %13 : vector<16xf32> to vector<16x1xf32>
    %15 = vector.broadcast %14 : vector<16x1xf32> to vector<16x128xf32>
    %16 = arith.subf %12, %15 : vector<16x128xf32>
    %17 = math.exp %16 : vector<16x128xf32>
    %cst_12 = arith.constant dense<0.000000e+00> : vector<16xf32>
    %18 = vector.multi_reduction <add>, %17, %cst_12 [1] : vector<16x128xf32> to vector<16xf32>
    %19 = vector.shape_cast %18 : vector<16xf32> to vector<16x1xf32>
    %20 = tpu.reciprocal %19 {approx = true} : vector<16x1xf32> -> vector<16x1xf32>
    %21 = arith.mulf %19, %20 : vector<16x1xf32>
    %cst_13 = arith.constant 2.000000e+00 : f32
    %22 = vector.broadcast %cst_13 : f32 to vector<16x1xf32>
    %23 = arith.subf %22, %21 : vector<16x1xf32>
    %24 = arith.mulf %20, %23 : vector<16x1xf32>
    %25 = arith.mulf %19, %24 : vector<16x1xf32>
    %cst_14 = arith.constant 2.000000e+00 : f32
    %26 = vector.broadcast %cst_14 : f32 to vector<16x1xf32>
    %27 = arith.subf %26, %25 : vector<16x1xf32>
    %28 = arith.mulf %24, %27 : vector<16x1xf32>
    %29 = vector.broadcast %28 : vector<16x1xf32> to vector<16x128xf32>
    %30 = arith.mulf %17, %29 : vector<16x128xf32>
    %31 = tpu.transpose %30, [1, 0] : vector<16x128xf32> -> vector<128x16xf32>
    %32 = vector.extract_strided_slice %31 {offsets = [0, 0], sizes = [4, 16], strides = [1, 1]} : vector<128x16xf32> to vector<4x16xf32>
    %c0_15 = arith.constant 0 : index
    %c0_16 = arith.constant 0 : index
    %33 = vector.load %arg6[%c0_15, %c0_16] : memref<4x16xf32, #tpu.memory_space<vmem>>, vector<4x16xf32>
    tpu.vector_store %arg6[%c0_15, %c0_16], %32 {strides = array<i32>} : memref<4x16xf32, #tpu.memory_space<vmem>>, vector<4x16xf32>,
    return
  }
  func.func @transform_0(%arg0: i32) -> (i32, i32) {
    %c0_i32 = arith.constant 0 : i32
    %c0_i32_0 = arith.constant 0 : i32
    return %arg0, %c0_i32 : i32, i32
  }
  func.func @transform_1(%arg0: i32) -> (i32, i32) {
    %c0_i32 = arith.constant 0 : i32
    %c0_i32_0 = arith.constant 0 : i32
    %c0_i32_1 = arith.constant 0 : i32
    return %c0_i32, %c0_i32_0 : i32, i32
  }
  func.func @transform_2(%arg0: i32) -> (i32, i32) {
    %c0_i32 = arith.constant 0 : i32
    %c0_i32_0 = arith.constant 0 : i32
    %c0_i32_1 = arith.constant 0 : i32
    return %c0_i32, %c0_i32_0 : i32, i32
  }
  func.func @transform_3(%arg0: i32) -> (i32, i32) {
    %c0_i32 = arith.constant 0 : i32
    %c0_i32_0 = arith.constant 0 : i32
    %c0_i32_1 = arith.constant 0 : i32
    return %c0_i32, %c0_i32_0 : i32, i32
  }
  func.func @transform_4(%arg0: i32) -> (i32, i32) {
    %c0_i32 = arith.constant 0 : i32
    %c0_i32_0 = arith.constant 0 : i32
    %c0_i32_1 = arith.constant 0 : i32
    return %c0_i32, %c0_i32_0 : i32, i32
  }
  func.func @transform_5(%arg0: i32) -> (i32, i32) {
    %c0_i32 = arith.constant 0 : i32
    %c0_i32_0 = arith.constant 0 : i32
    return %c0_i32, %arg0 : i32, i32
  }
}

</mosaic_0001>

<llo_original>
// kernel: tpu_custom_call.1
$region0: #{tpu_custom_call.1}
  #allocation0 [shape = 'u32[]', space=smem, size = 0x4, offset = 0x4, fixed_abs, tag = 'smem constant byte address 0x4 - core index']
  #allocation1 [shape = 'u32[144,128]{1,0:T(1,128)}', space=vmem, size = 0x12000, scoped, tag = 'internal scratch']
  %s0 = inlined_call_operand.hbm [shape: f32[16,32], index: 0, kind: input, shape index: {}]
  %s1 = inlined_call_operand.hbm [shape: f32[32,32], index: 1, kind: input, shape index: {}]
  %s2 = inlined_call_operand.vmem [shape: f32[1,32], index: 2, kind: input, shape index: {}]
  %s3 = inlined_call_operand.hbm [shape: f32[32,128], index: 3, kind: input, shape index: {}]
  %s4 = inlined_call_operand.vmem [shape: f32[1,128], index: 4, kind: input, shape index: {}]
  %s5 = inlined_call_operand.hbm [shape: f32[4,16], index: 5, kind: output, shape index: {}]
  %s6 = sld [smem:[#allocation0]]
  $region42: #{tpu_custom_call.1} parent=0
    _
  %s8 = ssub.s32 1, %s6
  %s9 = scalar_select 0, %s8, %s6
  $region1: #{tpu_custom_call.1} parent=0
    #allocation2 [shape = 'u8[8192]{0}', space=vmem, size = 0x2000, scoped, tag = 'input window, operand 0, single buffered']
    #allocation3 [shape = 's32[1]{0}', space=sflag, size = 0x4, scoped, tag = 'scoped memory for tpu_custom_call.1']
    #allocation4 [shape = 's32[1]{0}', space=sflag, size = 0x4, scoped, tag = 'scoped memory for tpu_custom_call.1']
    #allocation5 [shape = 'u8[16384]{0}', space=vmem, size = 0x4000, scoped, tag = 'input window, operand 1, single buffered']
    #allocation6 [shape = 's32[1]{0}', space=sflag, size = 0x4, scoped, tag = 'scoped memory for tpu_custom_call.1']
    #allocation7 [shape = 'u8[16384]{0}', space=vmem, size = 0x4000, scoped, tag = 'input window, operand 3, single buffered']
    #allocation8 [shape = 'u8[2048]{0}', space=vmem, size = 0x800, scoped, tag = 'output window, operand 0, single buffered']
    %10 = vsyncpa [#allocation3], 0
    %11 = vsyncpa [#allocation6], 0
    %12 = vsyncpa [#allocation4], 0
    // Predicated region
    $region2: #{tpu_custom_call.1} parent=1 // pred_check
      _
    $region3: #{tpu_custom_call.1} parent=1 // pred_check_branch
      %14 = sbr.rel (0) target = $region5
    $region4: #{tpu_custom_call.1} parent=1 // pred_region
      %s16 = ssub.s32 256, 256
      %17 = vsyncadd [#allocation3], %s16
      %s18 = sshll.u32 [#allocation2], 4
      %s19 = int_to_ptr.vmem [resolvable:$true] %s18
      %24 = dma.hbm_to_vmem [thread:$0]  %s0, 256, %s19, [#allocation3], 128, 128, 8
    $region5: #{tpu_custom_call.1} parent=1 // pred_fallthru
      _
    // Predicated region
    $region6: #{tpu_custom_call.1} parent=1 // pred_check
      _
    $region7: #{tpu_custom_call.1} parent=1 // pred_check_branch
      %26 = sbr.rel (0) target = $region9
    $region8: #{tpu_custom_call.1} parent=1 // pred_region
      %s28 = ssub.s32 512, 512
      %29 = vsyncadd [#allocation6], %s28
      %s30 = sshll.u32 [#allocation5], 4
      %s31 = int_to_ptr.vmem [resolvable:$true] %s30
      %36 = dma.hbm_to_vmem [thread:$0]  %s1, 512, %s31, [#allocation6], 128, 128, 8
    $region9: #{tpu_custom_call.1} parent=1 // pred_fallthru
      _
    // Predicated region
    $region10: #{tpu_custom_call.1} parent=1 // pred_check
      _
    $region11: #{tpu_custom_call.1} parent=1 // pred_check_branch
      %38 = sbr.rel (0) target = $region13
    $region12: #{tpu_custom_call.1} parent=1 // pred_region
      _
    $region13: #{tpu_custom_call.1} parent=1 // pred_fallthru
      _
    // Predicated region
    $region14: #{tpu_custom_call.1} parent=1 // pred_check
      _
    $region15: #{tpu_custom_call.1} parent=1 // pred_check_branch
      %40 = sbr.rel (0) target = $region17
    $region16: #{tpu_custom_call.1} parent=1 // pred_region
      %s42 = ssub.s32 512, 512
      %43 = vsyncadd [#allocation6], %s42
      %s44 = sshll.u32 [#allocation7], 4
      %s45 = int_to_ptr.vmem [resolvable:$true] %s44
      %50 = dma.hbm_to_vmem [thread:$0]  %s3, 512, %s45, [#allocation6], 128, 128, 8
    $region17: #{tpu_custom_call.1} parent=1 // pred_fallthru
      _
    // Predicated region
    $region18: #{tpu_custom_call.1} parent=1 // pred_check
      _
    $region19: #{tpu_custom_call.1} parent=1 // pred_check_branch
      %52 = sbr.rel (0) target = $region21
    $region20: #{tpu_custom_call.1} parent=1 // pred_region
      _
    $region21: #{tpu_custom_call.1} parent=1 // pred_fallthru
      _
    // Predicated region
    $region22: #{tpu_custom_call.1} parent=1 // pred_check
      _
    $region23: #{tpu_custom_call.1} parent=1 // pred_check_branch
      %54 = sbr.rel (0) target = $region25
    $region24: #{tpu_custom_call.1} parent=1 // pred_region
      %55 = dma.done [#allocation3], 256
    $region25: #{tpu_custom_call.1} parent=1 // pred_fallthru
      _
    // Predicated region
    $region26: #{tpu_custom_call.1} parent=1 // pred_check
      _
    $region27: #{tpu_custom_call.1} parent=1 // pred_check_branch
      %57 = sbr.rel (0) target = $region29
    $region28: #{tpu_custom_call.1} parent=1 // pred_region
      %58 = dma.done [#allocation6], 512
    $region29: #{tpu_custom_call.1} parent=1 // pred_fallthru
      _
    // Predicated region
    $region30: #{tpu_custom_call.1} parent=1 // pred_check
      _
    $region31: #{tpu_custom_call.1} parent=1 // pred_check_branch
      %60 = sbr.rel (0) target = $region33
    $region32: #{tpu_custom_call.1} parent=1 // pred_region
      %61 = dma.done [#allocation6], 512
    $region33: #{tpu_custom_call.1} parent=1 // pred_fallthru
      _
    %v62 = vld [vmem:[#allocation2] sm:$0xff]
    %v63 = vld [vmem:[#allocation2 + $0x8] sm:$0xff]
    %v64 = vld [vmem:[#allocation5] sm:$0xff]
    %v65 = vld [vmem:[#allocation5 + $0x8] sm:$0xff]
    %v66 = vld [vmem:[#allocation5 + $0x10] sm:$0xff]
    %v67 = vld [vmem:[#allocation5 + $0x18] sm:$0xff]
    %v68 = vld [vmem:[%s2] sm:$0x1]
    %v70 = vlaneseq
    %v71 = vshrl.u32 %v70, 7
    %v72 = vsub.s32 0, %v71
    %v73 = vrot.slane %v68, %v72
    %vm75 = vcmask 261120
    %v77 = vsel %vm75, %v62, 0
    %v80 = vsel %vm75, %v63, 0
    %82 = vmatprep.subr.mxu0 0.0
    %83 = vmatpush1.msra.mxu0 0.0
    %84 = vmatprep.subr.mxu0 0.0
    %85 = vmatpush1.msra.mxu0 0.0
    %86 = vmatprep.subr.mxu0 0.0
    %87 = vmatpush1.msra.mxu0 0.0
    %88 = vmatprep.subr.mxu0 0.0
    %89 = vmatpush1.msra.mxu0 0.0
    %90 = vmatprep.subr.mxu0 0.0
    %91 = vmatpush1.msra.mxu0 0.0
    %92 = vmatprep.subr.mxu0 0.0
    %93 = vmatpush1.msra.mxu0 0.0
    %94 = vmatprep.subr.mxu0 0.0
    %95 = vmatpush1.msra.mxu0 0.0
    %96 = vmatprep.subr.mxu0 0.0
    %97 = vmatpush1.msra.mxu0 0.0
    %98 = vmatprep.subr.mxu0 0.0
    %99 = vmatpush1.msra.mxu0 0.0
    %100 = vmatprep.subr.mxu0 0.0
    %101 = vmatpush1.msra.mxu0 0.0
    %102 = vmatprep.subr.mxu0 0.0
    %103 = vmatpush1.msra.mxu0 0.0
    %104 = vmatprep.subr.mxu0 0.0
    %105 = vmatpush1.msra.mxu0 0.0
    %106 = vmatprep.subr.mxu0 0.0
    %107 = vmatpush1.msra.mxu0 %v67
    %108 = vmatprep.subr.mxu0 0.0
    %109 = vmatpush1.msra.mxu0 %v66
    %110 = vmatprep.subr.mxu0 0.0
    %111 = vmatpush1.msra.mxu0 %v65
    %112 = vmatprep.subr.mxu0 0.0
    %113 = vmatpush1.msra.mxu0 %v64
    %114 = vmatprep.subr.mxu0 0.0
    %115 = vmatpush2.msra.mxu0 0.0
    %116 = vmatprep.subr.mxu0 0.0
    %117 = vmatpush2.msra.mxu0 0.0
    %118 = vmatprep.subr.mxu0 0.0
    %119 = vmatpush2.msra.mxu0 0.0
    %120 = vmatprep.subr.mxu0 0.0
    %121 = vmatpush2.msra.mxu0 0.0
    %122 = vmatprep.subr.mxu0 0.0
    %123 = vmatpush2.msra.mxu0 0.0
    %124 = vmatprep.subr.mxu0 0.0
    %125 = vmatpush2.msra.mxu0 0.0
    %126 = vmatprep.subr.mxu0 0.0
    %127 = vmatpush2.msra.mxu0 0.0
    %128 = vmatprep.subr.mxu0 0.0
    %129 = vmatpush2.msra.mxu0 0.0
    %130 = vmatprep.subr.mxu0 0.0
    %131 = vmatpush2.msra.mxu0 0.0
    %132 = vmatprep.subr.mxu0 0.0
    %133 = vmatpush2.msra.mxu0 0.0
    %134 = vmatprep.subr.mxu0 0.0
    %135 = vmatpush2.msra.mxu0 0.0
    %136 = vmatprep.subr.mxu0 0.0
    %137 = vmatpush2.msra.mxu0 0.0
    %138 = vmatprep.subr.mxu0 0.0
    %139 = vmatpush2.msra.mxu0 0.0
    %140 = vmatprep.subr.mxu0 0.0
    %141 = vmatpush2.msra.mxu0 0.0
    %142 = vmatprep.subr.mxu0 0.0
    %143 = vmatpush2.msra.mxu0 0.0
    %144 = vmatprep.subr.mxu0 0.0
    %145 = vmatpush2.msra.mxu0 0.0
    %146 = vmatprep.mubr.f32.mxu0 0.0
    %147 = vmatmul.mubr.f32.gmra.mxu0 %v77
    %v148 = vpop.f32.mrf.mxu0
    %v149 = vadd.f32 %v73, %v148
    %v150 = vpop.f32.mrf.mxu0
    %151 = vmatprep.mubr.f32.mxu0 0.0
    %152 = vmatmul.mubr.f32.gmra.mxu0 %v80
    %v153 = vpop.f32.mrf.mxu0
    %v154 = vadd.f32 %v73, %v153
    %v155 = vpop.f32.mrf.mxu0
    %156 = vdwg.mxu0
    %v157 = vmax.f32 %v149, 0.0
    %v158 = vmax.f32 %v154, 0.0
    %v159 = vld [vmem:[#allocation7] sm:$0xff]
    %v160 = vld [vmem:[#allocation7 + $0x8] sm:$0xff]
    %v161 = vld [vmem:[#allocation7 + $0x10] sm:$0xff]
    %v162 = vld [vmem:[#allocation7 + $0x18] sm:$0xff]
    %v163 = vld [vmem:[%s4] sm:$0x1]
    %v165 = vlaneseq
    %v166 = vshrl.u32 %v165, 7
    %v167 = vsub.s32 0, %v166
    %v168 = vrot.slane %v163, %v167
    %v171 = vsel %vm75, %v157, 0
    %v174 = vsel %vm75, %v158, 0
    %176 = vmatprep.subr.mxu0 0.0
    %177 = vmatpush1.msra.mxu0 0.0
    %178 = vmatprep.subr.mxu0 0.0
    %179 = vmatpush1.msra.mxu0 0.0
    %180 = vmatprep.subr.mxu0 0.0
    %181 = vmatpush1.msra.mxu0 0.0
    %182 = vmatprep.subr.mxu0 0.0
    %183 = vmatpush1.msra.mxu0 0.0
    %184 = vmatprep.subr.mxu0 0.0
    %185 = vmatpush1.msra.mxu0 0.0
    %186 = vmatprep.subr.mxu0 0.0
    %187 = vmatpush1.msra.mxu0 0.0
    %188 = vmatprep.subr.mxu0 0.0
    %189 = vmatpush1.msra.mxu0 0.0
    %190 = vmatprep.subr.mxu0 0.0
    %191 = vmatpush1.msra.mxu0 0.0
    %192 = vmatprep.subr.mxu0 0.0
    %193 = vmatpush1.msra.mxu0 0.0
    %194 = vmatprep.subr.mxu0 0.0
    %195 = vmatpush1.msra.mxu0 0.0
    %196 = vmatprep.subr.mxu0 0.0
    %197 = vmatpush1.msra.mxu0 0.0
    %198 = vmatprep.subr.mxu0 0.0
    %199 = vmatpush1.msra.mxu0 0.0
    %200 = vmatprep.subr.mxu0 0.0
    %201 = vmatpush1.msra.mxu0 %v162
    %202 = vmatprep.subr.mxu0 0.0
    %203 = vmatpush1.msra.mxu0 %v161
    %204 = vmatprep.subr.mxu0 0.0
    %205 = vmatpush1.msra.mxu0 %v160
    %206 = vmatprep.subr.mxu0 0.0
    %207 = vmatpush1.msra.mxu0 %v159
    %208 = vmatprep.subr.mxu0 0.0
    %209 = vmatpush2.msra.mxu0 0.0
    %210 = vmatprep.subr.mxu0 0.0
    %211 = vmatpush2.msra.mxu0 0.0
    %212 = vmatprep.subr.mxu0 0.0
    %213 = vmatpush2.msra.mxu0 0.0
    %214 = vmatprep.subr.mxu0 0.0
    %215 = vmatpush2.msra.mxu0 0.0
    %216 = vmatprep.subr.mxu0 0.0
    %217 = vmatpush2.msra.mxu0 0.0
    %218 = vmatprep.subr.mxu0 0.0
    %219 = vmatpush2.msra.mxu0 0.0
    %220 = vmatprep.subr.mxu0 0.0
    %221 = vmatpush2.msra.mxu0 0.0
    %222 = vmatprep.subr.mxu0 0.0
    %223 = vmatpush2.msra.mxu0 0.0
    %224 = vmatprep.subr.mxu0 0.0
    %225 = vmatpush2.msra.mxu0 0.0
    %226 = vmatprep.subr.mxu0 0.0
    %227 = vmatpush2.msra.mxu0 0.0
    %228 = vmatprep.subr.mxu0 0.0
    %229 = vmatpush2.msra.mxu0 0.0
    %230 = vmatprep.subr.mxu0 0.0
    %231 = vmatpush2.msra.mxu0 0.0
    %232 = vmatprep.subr.mxu0 0.0
    %233 = vmatpush2.msra.mxu0 0.0
    %234 = vmatprep.subr.mxu0 0.0
    %235 = vmatpush2.msra.mxu0 0.0
    %236 = vmatprep.subr.mxu0 0.0
    %237 = vmatpush2.msra.mxu0 0.0
    %238 = vmatprep.subr.mxu0 0.0
    %239 = vmatpush2.msra.mxu0 0.0
    %240 = vmatprep.mubr.f32.mxu0 0.0
    %241 = vmatmul.mubr.f32.gmra.mxu0 %v171
    %v242 = vpop.f32.mrf.mxu0
    %v243 = vadd.f32 %v168, %v242
    %v244 = vpop.f32.mrf.mxu0
    %245 = vmatprep.mubr.f32.mxu0 0.0
    %246 = vmatmul.mubr.f32.gmra.mxu0 %v174
    %v247 = vpop.f32.mrf.mxu0
    %v248 = vadd.f32 %v168, %v247
    %v249 = vpop.f32.mrf.mxu0
    %250 = vdwg.mxu0
    %251 = vmax.xlane.f32.xlu0 %v243
    %v252 = vpop.xlane.xlu0 %251
    %253 = vmax.xlane.f32.xlu0 %v248
    %v254 = vpop.xlane.xlu0 %253
    %v255 = vsub.f32 %v243, %v252
    %v256 = vsub.f32 %v248, %v254
    %v257 = vmul.f32 %v255, 1.442695
    %v258 = vpow.pop %v257
    %v259 = vmul.f32 %v256, 1.442695
    %v260 = vpow.pop %v259
    %261 = vadd.xlane.f32.xlu0 %v258
    %v262 = vpop.xlane.xlu0 %261
    %263 = vadd.xlane.f32.xlu0 %v260
    %v264 = vpop.xlane.xlu0 %263
    %v265 = vrcp.pop %v262
    %v266 = vrcp.pop %v264
    %v267 = vmul.f32 %v262, %v265
    %v268 = vmul.f32 %v264, %v266
    %v269 = vsub.f32 2.0, %v267
    %v270 = vsub.f32 2.0, %v268
    %v271 = vmul.f32 %v265, %v269
    %v272 = vmul.f32 %v266, %v270
    %v273 = vmul.f32 %v262, %v271
    %v274 = vmul.f32 %v264, %v272
    %v275 = vsub.f32 2.0, %v273
    %v276 = vsub.f32 2.0, %v274
    %v277 = vmul.f32 %v271, %v275
    %v278 = vmul.f32 %v272, %v276
    %v279 = vmul.f32 %v258, %v277
    %v280 = vmul.f32 %v260, %v278
    %281 = vxpose.xlu0.b32.start [1/16] %v279, 128
    %282 = vxpose.xlu0.b32.cont [2/16] %v280, 128
    %283 = vxpose.xlu0.b32.cont [3/16] 0.0, 128
    %284 = vxpose.xlu0.b32.cont [4/16] 0.0, 128
    %285 = vxpose.xlu0.b32.cont [5/16] 0.0, 128
    %286 = vxpose.xlu0.b32.cont [6/16] 0.0, 128
    %287 = vxpose.xlu0.b32.cont [7/16] 0.0, 128
    %288 = vxpose.xlu0.b32.cont [8/16] 0.0, 128
    %289 = vxpose.xlu0.b32.cont [9/16] 0.0, 128
    %290 = vxpose.xlu0.b32.cont [10/16] 0.0, 128
    %291 = vxpose.xlu0.b32.cont [11/16] 0.0, 128
    %292 = vxpose.xlu0.b32.cont [12/16] 0.0, 128
    %293 = vxpose.xlu0.b32.cont [13/16] 0.0, 128
    %294 = vxpose.xlu0.b32.cont [14/16] 0.0, 128
    %295 = vxpose.xlu0.b32.cont [15/16] 0.0, 128
    %296 = vxpose.xlu0.b32.end [16/16] 0.0, 128
    %v297 = vpop.trf.xlu0
    %v298 = vpop.trf.xlu0
    %v299 = vpop.trf.xlu0
    %v300 = vpop.trf.xlu0
    %v301 = vpop.trf.xlu0
    %v302 = vpop.trf.xlu0
    %v303 = vpop.trf.xlu0
    %v304 = vpop.trf.xlu0
    %v305 = vpop.trf.xlu0
    %v306 = vpop.trf.xlu0
    %v307 = vpop.trf.xlu0
    %v308 = vpop.trf.xlu0
    %v309 = vpop.trf.xlu0
    %v310 = vpop.trf.xlu0
    %v311 = vpop.trf.xlu0
    %v312 = vpop.trf.xlu0
    %vm313 = vcmask 125952
    %314 = vst.msk [vmem:[#allocation8] sm:$0xf] %vm313, %v297
    // Predicated region
    $region34: #{tpu_custom_call.1} parent=1 // pred_check
      _
    $region35: #{tpu_custom_call.1} parent=1 // pred_check_branch
      %316 = sbr.rel (0) target = $region37
    $region36: #{tpu_custom_call.1} parent=1 // pred_region
      %s318 = ssub.s32 64, 64
      %319 = vsyncadd [#allocation4], %s318
      %s321 = sshll.u32 [#allocation8], 4
      %s322 = int_to_ptr.vmem [resolvable:$true] %s321
      %324 = dma.vmem_to_hbm [thread:$0]  %s322, 64, %s5, [#allocation4]
    $region37: #{tpu_custom_call.1} parent=1 // pred_fallthru
      _
    // Predicated region
    $region38: #{tpu_custom_call.1} parent=1 // pred_check
      _
    $region39: #{tpu_custom_call.1} parent=1 // pred_check_branch
      %326 = sbr.rel (0) target = $region41
    $region40: #{tpu_custom_call.1} parent=1 // pred_region
      %327 = dma.done [#allocation4], 64
    $region41: #{tpu_custom_call.1} parent=1 // pred_fallthru
      _
    %328 = vsyncpa [#allocation3], 1
    %329 = vsyncpa [#allocation6], 1
    %330 = vsyncpa [#allocation4], 1

</llo_original>
